<compile_context>
chip_gen: v5e
topology: v5e:2x2
jax: 0.10.0
libtpu: 0.0.40
codegen_flags: <defaults>
</compile_context>

<pallas_src>
import functools

import jax
import jax.numpy as jnp
import numpy as np
from jax import lax
from jax.experimental import pallas as pl
from jax.experimental.pallas import tpu as pltpu


def _round_up(a, b):
    return ((a + b - 1) // b) * b


def _write_partial(o_ref, loss):
    # Store partial / (8*128) broadcast across the lane-dense output block; the
    # wrapper sums the whole output array (no strided gather, unmasked stores).
    scale = 1.0 / float(o_ref.shape[-1] * o_ref.shape[-2])
    scaled = jnp.sum(loss) * scale
    o_ref[...] = jnp.broadcast_to(scaled, o_ref.shape).astype(o_ref.dtype)


def _tcl_kernel_flat(x_ref, mt_ref, mflat_ref, seg_ref, off_ref, o_ref, *,
                     margin, n_valid):
    # x_ref:     (tn, F)   lane-dense tile of X, F = K*D
    # mt_ref:    (K, F)    row j = means[j] tiled K times
    # mflat_ref: (1, F)    means flattened (concat of means[0..K-1])
    # seg_ref:   (F, K)    0/1 segment-sum matrix (sums each D-lane group)
    # off_ref:   (K, K)    1e6 * I (torch.diagflat parity)
    # o_ref:     (1, 8, 128) per-tile partial-sum block
    i = pl.program_id(0)
    x = x_ref[...].astype(jnp.float32)          # (tn, F)
    mt = mt_ref[...]                            # (K, F) f32
    seg = seg_ref[...]                          # (F, K) f32
    off = off_ref[...]                          # (K, K) f32
    tn = x.shape[0]
    K = mt.shape[0]

    def seg_sum(v):                             # (tn, F) -> (tn, K), on the MXU
        return lax.dot_general(v, seg,
                               dimension_numbers=(((1,), (0,)), ((), ())),
                               preferred_element_type=jnp.float32)

    # pos[n, k] = ||x[n, k] - means[k]||^2 : exact squared diff, full-lane VPU.
    dpos = x - mflat_ref[...]
    pos = seg_sum(dpos * dpos)                  # (tn, K)

    # neg[n, k] = min_j ( ||x[n, k] - means[j]||^2 + 1e6 * [j == k] ).
    # Unrolled over j (K is small): one full-lane diff/square + one segment sum
    # per center; running minimum instead of a materialized (tn, K, K) dist.
    neg = None
    for j in range(K):
        d = x - mt[j][None, :]                  # (tn, F) full-lane VPU
        dist_j = seg_sum(d * d)                 # (tn, K): dist_j[:,k]=||x[:,k]-m[j]||^2
        adj = dist_j + off[j][None, :]          # +1e6 on the k == j column
        neg = adj if neg is None else jnp.minimum(neg, adj)

    loss = jnp.maximum(pos + margin - neg, 0.0)                     # (tn, K)
    rows = i * tn + lax.broadcasted_iota(jnp.int32, loss.shape, 0)
    loss = jnp.where(rows < n_valid, loss, 0.0)                     # ragged tail
    _write_partial(o_ref, loss)


def _tcl_kernel_gram(x_ref, m_ref, msq_ref, off_ref, o_ref, *, margin, n_valid):
    # MXU Gram path, used when D >= 128 (contraction dim big enough).
    # x_ref: (tn, K, D) tile in storage dtype; m_ref: (K, D) f32 means;
    # msq_ref: (1, K) f32 = ||means[j]||^2; off_ref: (K, K) = 1e6 * I.
    i = pl.program_id(0)
    x = x_ref[...]
    m32 = m_ref[...]
    xf = x.astype(jnp.float32)
    tn = xf.shape[0]

    # pos from the exact squared difference (no cancellation on the diagonal).
    dpos = xf - m32[None, :, :]
    pos = jnp.sum(dpos * dpos, axis=-1)                        # (tn, K)

    # Full (tn, K, K) distances via Gram; the x.m dot stays in the input dtype
    # (bf16 in -> bf16 MXU at 2x the f32 rate) with f32 accumulation.
    x2 = jnp.sum(xf * xf, axis=-1)                             # (tn, K)
    xm = lax.dot_general(x, m32.astype(x.dtype),
                         dimension_numbers=(((2,), (1,)), ((), ())),
                         preferred_element_type=jnp.float32)   # (tn, K, K)
    dist = jnp.maximum(x2[:, :, None] + msq_ref[...][None, :, :] - 2.0 * xm, 0.0)

    neg = jnp.min(dist + off_ref[...][None, :, :], axis=-1)    # (tn, K)
    loss = jnp.maximum(pos + margin - neg, 0.0)
    rows = i * tn + lax.broadcasted_iota(jnp.int32, loss.shape, 0)
    loss = jnp.where(rows < n_valid, loss, 0.0)
    _write_partial(o_ref, loss)


def triplet_center_loss(x, margin=1.0, *, block_n=1024):
    """x: (N, K, D) float array (f32 or bf16). Returns scalar float32 loss."""
    N, K, D = x.shape
    F = K * D

    # Batch mean hoisted to XLA: one pass over X in its storage dtype with f32
    # accumulation (no f32 copy of X is materialized).
    means = jnp.mean(x, axis=0, dtype=jnp.float32)              # (K, D) f32
    diag_off = jnp.eye(K, dtype=jnp.float32) * 1e6              # torch parity

    use_gram = D >= 128    # gate the MXU path on the contraction dim only

    # ---- tile-size selection -------------------------------------------------
    itemsize = x.dtype.itemsize
    # double-buffered input tile + a few f32-sized temporaries per row
    bytes_per_row = F * (2 * itemsize + (6 if use_gram else 4) * 4)
    vmem_budget = 16 * 1024 * 1024   # conservative: fits v7x's scoped VMEM default
    max_tn = max(8, (vmem_budget // max(bytes_per_row, 1)) // 8 * 8)

    if N <= min(block_n, max_tn):
        tn = N                        # one tile covers the whole batch
    else:
        # multiple-of-8 tiles, and at least 2 tiles so the "parallel" axis can
        # shard across v7x's two TensorCores.
        tn = min(_round_up(block_n, 8), _round_up(pl.cdiv(N, 2), 8), max_tn)
        tn = max(tn, 8)
    num_tiles = pl.cdiv(N, tn)

    out_shape = jax.ShapeDtypeStruct((num_tiles, 8, 128), jnp.float32)
    out_spec = pl.BlockSpec((1, 8, 128), lambda i: (i, 0, 0))
    cparams = pltpu.CompilerParams(dimension_semantics=("parallel",))

    if use_gram:
        m_sq = jnp.sum(means * means, axis=1).reshape(1, K)     # (1, K) f32
        kernel = functools.partial(_tcl_kernel_gram,
                                   margin=float(margin), n_valid=N)
        partials = pl.pallas_call(
            kernel, out_shape=out_shape, grid=(num_tiles,),
            in_specs=[
                pl.BlockSpec((tn, K, D), lambda i: (i, 0, 0)),  # X tile
                pl.BlockSpec((K, D), lambda i: (0, 0)),         # means (f32)
                pl.BlockSpec((1, K), lambda i: (0, 0)),         # ||means||^2
                pl.BlockSpec((K, K), lambda i: (0, 0)),         # 1e6 * I
            ],
            out_specs=out_spec, compiler_params=cparams,
        )(x, means, m_sq, diag_off)
    else:
        # Lane-dense layout: flatten (K, D) into one contiguous feature axis.
        x_flat = x.reshape(N, F)                                # free (row-major)
        means_flat = means.reshape(1, F)                        # (1, K*D)
        means_tiled = jnp.tile(means, (1, K))                   # (K, K*D)
        seg = jnp.repeat(jnp.eye(K, dtype=jnp.float32), D, axis=0)  # (K*D, K)

        kernel = functools.partial(_tcl_kernel_flat,
                                   margin=float(margin), n_valid=N)
        partials = pl.pallas_call(
            kernel, out_shape=out_shape, grid=(num_tiles,),
            in_specs=[
                pl.BlockSpec((tn, F), lambda i: (i, 0)),        # X tile (lane-dense)
                pl.BlockSpec((K, F), lambda i: (0, 0)),         # tiled means
                pl.BlockSpec((1, F), lambda i: (0, 0)),         # flattened means
                pl.BlockSpec((F, K), lambda i: (0, 0)),         # segment-sum matrix
                pl.BlockSpec((K, K), lambda i: (0, 0)),         # 1e6 * I
            ],
            out_specs=out_spec, compiler_params=cparams,
        )(x_flat, means_tiled, means_flat, seg, diag_off)

    # Each tile stored partial/1024 broadcast across its (8, 128) block; summing
    # the whole array recovers the total, then finish the mean over N*K terms.
    return jnp.sum(partials) / (N * K)


def _reference_loss(x, margin=1.0):
    # Pure-JAX mirror of the PyTorch forward, for the correctness check.
    x = x.astype(jnp.float32)
    means = jnp.mean(x, axis=0)[None, :, :]                      # (1, K, D)
    dist = jnp.sum((x[:, :, None, :] - means[:, None, :, :]) ** 2, axis=-1)
    K = x.shape[1]
    pos = jnp.diagonal(dist, axis1=1, axis2=2)                   # (N, K)
    offset = (jnp.eye(K, dtype=jnp.float32) * 1e6)[None, :, :]
    neg = jnp.min(dist + offset, axis=-1)
    return jnp.mean(jnp.maximum(pos + margin - neg, 0.0))


if __name__ == "__main__":
    key = jax.random.PRNGKey(0)

    # Shapes consistent with the module: (batch, num_transforms, feature_dim).
    N, K, D = 8, 4, 32
    x = jax.random.normal(key, (N, K, D), dtype=jnp.float32)
    loss = jax.block_until_ready(triplet_center_loss(x, margin=1.0))
    ref = jax.block_until_ready(_reference_loss(x, margin=1.0))
    assert np.allclose(np.asarray(loss), np.asarray(ref), rtol=5e-4, atol=5e-4), (
        loss, ref)

    # Second check: multi-tile grid + ragged tail + bf16 storage dtype
    # (exercises the "parallel" N axis, multiple-of-8 tile rounding, the row
    # mask, and the no-f32-copy mean path).
    N2 = 10
    x2 = jax.random.normal(jax.random.PRNGKey(1), (N2, K, D), dtype=jnp.bfloat16)
    loss2 = jax.block_until_ready(triplet_center_loss(x2, margin=1.0, block_n=8))
    ref2 = jax.block_until_ready(_reference_loss(x2, margin=1.0))
    assert np.allclose(np.asarray(loss2), np.asarray(ref2), rtol=2e-3, atol=2e-3), (
        loss2, ref2)

    print("KERNEL_OK")
</pallas_src>

<mosaic_0001>
module attributes {stable_mosaic.version = 11 : i64} {
  func.func @_tcl_kernel_flat(%arg0: i32, %arg1: memref<8x128xf32, #tpu.memory_space<vmem>>, %arg2: memref<4x128xf32, #tpu.memory_space<vmem>>, %arg3: memref<1x128xf32, #tpu.memory_space<vmem>>, %arg4: memref<128x4xf32, #tpu.memory_space<vmem>>, %arg5: memref<4x4xf32, #tpu.memory_space<vmem>>, %arg6: memref<1x8x128xf32, #tpu.memory_space<vmem>>) attributes {dimension_semantics = [#tpu.dimension_semantics<parallel>], iteration_bounds = array<i64: 1>, scalar_prefetch = 0 : i64, scratch_operands = 0 : i64, tpu.core_type = #tpu.core_type<tc>, window_params = [{transform_indices = @transform_0, window_bounds = array<i64: 8, 128>}, {pipeline_mode = #tpu.pipeline_mode<synchronous>, transform_indices = @transform_1, window_bounds = array<i64: 4, 128>}, {pipeline_mode = #tpu.pipeline_mode<synchronous>, transform_indices = @transform_2, window_bounds = array<i64: 1, 128>}, {pipeline_mode = #tpu.pipeline_mode<synchronous>, transform_indices = @transform_3, window_bounds = array<i64: 128, 4>}, {pipeline_mode = #tpu.pipeline_mode<synchronous>, transform_indices = @transform_4, window_bounds = array<i64: 4, 4>}, {transform_indices = @transform_5, window_bounds = array<i64: 1, 8, 128>}]} {
    %c0 = arith.constant 0 : index
    %c0_0 = arith.constant 0 : index
    %0 = vector.load %arg1[%c0, %c0_0] : memref<8x128xf32, #tpu.memory_space<vmem>>, vector<8x128xf32>
    %c0_1 = arith.constant 0 : index
    %c0_2 = arith.constant 0 : index
    %1 = vector.load %arg2[%c0_1, %c0_2] : memref<4x128xf32, #tpu.memory_space<vmem>>, vector<4x128xf32>
    %c0_3 = arith.constant 0 : index
    %c0_4 = arith.constant 0 : index
    %2 = vector.load %arg4[%c0_3, %c0_4] : memref<128x4xf32, #tpu.memory_space<vmem>>, vector<128x4xf32>
    %c0_5 = arith.constant 0 : index
    %c0_6 = arith.constant 0 : index
    %3 = vector.load %arg5[%c0_5, %c0_6] : memref<4x4xf32, #tpu.memory_space<vmem>>, vector<4x4xf32>
    %c0_7 = arith.constant 0 : index
    %c0_8 = arith.constant 0 : index
    %4 = vector.load %arg3[%c0_7, %c0_8] : memref<1x128xf32, #tpu.memory_space<vmem>>, vector<1x128xf32>
    %5 = vector.broadcast %4 : vector<1x128xf32> to vector<8x128xf32>
    %6 = arith.subf %0, %5 : vector<8x128xf32>
    %7 = arith.mulf %6, %6 : vector<8x128xf32>
    %cst = arith.constant dense<0.000000e+00> : vector<8x4xf32>
    %8 = tpu.matmul %7, %2, %cst {dimension_numbers = #tpu.dot_dimension_numbers<[1], [0], [0], [1], [0, 0, 1, 1], [], []>} : vector<8x128xf32>, vector<128x4xf32>, vector<8x4xf32> -> vector<8x4xf32>
    %9 = vector.extract_strided_slice %1 {offsets = [0, 0], sizes = [1, 128], strides = [1, 1]} : vector<4x128xf32> to vector<1x128xf32>
    %10 = vector.shape_cast %9 : vector<1x128xf32> to vector<128xf32>
    %11 = vector.shape_cast %10 : vector<128xf32> to vector<1x128xf32>
    %12 = vector.broadcast %11 : vector<1x128xf32> to vector<8x128xf32>
    %13 = arith.subf %0, %12 : vector<8x128xf32>
    %14 = arith.mulf %13, %13 : vector<8x128xf32>
    %cst_9 = arith.constant dense<0.000000e+00> : vector<8x4xf32>
    %15 = tpu.matmul %14, %2, %cst_9 {dimension_numbers = #tpu.dot_dimension_numbers<[1], [0], [0], [1], [0, 0, 1, 1], [], []>} : vector<8x128xf32>, vector<128x4xf32>, vector<8x4xf32> -> vector<8x4xf32>
    %16 = vector.extract_strided_slice %3 {offsets = [0, 0], sizes = [1, 4], strides = [1, 1]} : vector<4x4xf32> to vector<1x4xf32>
    %17 = vector.shape_cast %16 : vector<1x4xf32> to vector<4xf32>
    %18 = vector.shape_cast %17 : vector<4xf32> to vector<1x4xf32>
    %19 = vector.broadcast %18 : vector<1x4xf32> to vector<8x4xf32>
    %20 = arith.addf %15, %19 : vector<8x4xf32>
    %21 = vector.extract_strided_slice %1 {offsets = [1, 0], sizes = [1, 128], strides = [1, 1]} : vector<4x128xf32> to vector<1x128xf32>
    %22 = vector.shape_cast %21 : vector<1x128xf32> to vector<128xf32>
    %23 = vector.shape_cast %22 : vector<128xf32> to vector<1x128xf32>
    %24 = vector.broadcast %23 : vector<1x128xf32> to vector<8x128xf32>
    %25 = arith.subf %0, %24 : vector<8x128xf32>
    %26 = arith.mulf %25, %25 : vector<8x128xf32>
    %cst_10 = arith.constant dense<0.000000e+00> : vector<8x4xf32>
    %27 = tpu.matmul %26, %2, %cst_10 {dimension_numbers = #tpu.dot_dimension_numbers<[1], [0], [0], [1], [0, 0, 1, 1], [], []>} : vector<8x128xf32>, vector<128x4xf32>, vector<8x4xf32> -> vector<8x4xf32>
    %28 = vector.extract_strided_slice %3 {offsets = [1, 0], sizes = [1, 4], strides = [1, 1]} : vector<4x4xf32> to vector<1x4xf32>
    %29 = vector.shape_cast %28 : vector<1x4xf32> to vector<4xf32>
    %30 = vector.shape_cast %29 : vector<4xf32> to vector<1x4xf32>
    %31 = vector.broadcast %30 : vector<1x4xf32> to vector<8x4xf32>
    %32 = arith.addf %27, %31 : vector<8x4xf32>
    %33 = arith.minimumf %20, %32 : vector<8x4xf32>
    %34 = vector.extract_strided_slice %1 {offsets = [2, 0], sizes = [1, 128], strides = [1, 1]} : vector<4x128xf32> to vector<1x128xf32>
    %35 = vector.shape_cast %34 : vector<1x128xf32> to vector<128xf32>
    %36 = vector.shape_cast %35 : vector<128xf32> to vector<1x128xf32>
    %37 = vector.broadcast %36 : vector<1x128xf32> to vector<8x128xf32>
    %38 = arith.subf %0, %37 : vector<8x128xf32>
    %39 = arith.mulf %38, %38 : vector<8x128xf32>
    %cst_11 = arith.constant dense<0.000000e+00> : vector<8x4xf32>
    %40 = tpu.matmul %39, %2, %cst_11 {dimension_numbers = #tpu.dot_dimension_numbers<[1], [0], [0], [1], [0, 0, 1, 1], [], []>} : vector<8x128xf32>, vector<128x4xf32>, vector<8x4xf32> -> vector<8x4xf32>
    %41 = vector.extract_strided_slice %3 {offsets = [2, 0], sizes = [1, 4], strides = [1, 1]} : vector<4x4xf32> to vector<1x4xf32>
    %42 = vector.shape_cast %41 : vector<1x4xf32> to vector<4xf32>
    %43 = vector.shape_cast %42 : vector<4xf32> to vector<1x4xf32>
    %44 = vector.broadcast %43 : vector<1x4xf32> to vector<8x4xf32>
    %45 = arith.addf %40, %44 : vector<8x4xf32>
    %46 = arith.minimumf %33, %45 : vector<8x4xf32>
    %47 = vector.extract_strided_slice %1 {offsets = [3, 0], sizes = [1, 128], strides = [1, 1]} : vector<4x128xf32> to vector<1x128xf32>
    %48 = vector.shape_cast %47 : vector<1x128xf32> to vector<128xf32>
    %49 = vector.shape_cast %48 : vector<128xf32> to vector<1x128xf32>
    %50 = vector.broadcast %49 : vector<1x128xf32> to vector<8x128xf32>
    %51 = arith.subf %0, %50 : vector<8x128xf32>
    %52 = arith.mulf %51, %51 : vector<8x128xf32>
    %cst_12 = arith.constant dense<0.000000e+00> : vector<8x4xf32>
    %53 = tpu.matmul %52, %2, %cst_12 {dimension_numbers = #tpu.dot_dimension_numbers<[1], [0], [0], [1], [0, 0, 1, 1], [], []>} : vector<8x128xf32>, vector<128x4xf32>, vector<8x4xf32> -> vector<8x4xf32>
    %54 = vector.extract_strided_slice %3 {offsets = [3, 0], sizes = [1, 4], strides = [1, 1]} : vector<4x4xf32> to vector<1x4xf32>
    %55 = vector.shape_cast %54 : vector<1x4xf32> to vector<4xf32>
    %56 = vector.shape_cast %55 : vector<4xf32> to vector<1x4xf32>
    %57 = vector.broadcast %56 : vector<1x4xf32> to vector<8x4xf32>
    %58 = arith.addf %53, %57 : vector<8x4xf32>
    %59 = arith.minimumf %46, %58 : vector<8x4xf32>
    %cst_13 = arith.constant 1.000000e+00 : f32
    %60 = vector.broadcast %cst_13 : f32 to vector<8x4xf32>
    %61 = arith.addf %8, %60 : vector<8x4xf32>
    %62 = arith.subf %61, %59 : vector<8x4xf32>
    %cst_14 = arith.constant 0.000000e+00 : f32
    %63 = vector.broadcast %cst_14 : f32 to vector<8x4xf32>
    %64 = arith.maximumf %62, %63 : vector<8x4xf32>
    %c8_i32 = arith.constant 8 : i32
    %65 = arith.muli %arg0, %c8_i32 : i32
    %66 = tpu.iota {dimensions = array<i32: 0>} : vector<8x4xi32>
    %67 = vector.broadcast %65 : i32 to vector<8x4xi32>
    %68 = arith.addi %67, %66 : vector<8x4xi32>
    %c8_i32_15 = arith.constant 8 : i32
    %69 = vector.broadcast %c8_i32_15 : i32 to vector<8x4xi32>
    %70 = arith.cmpi slt, %68, %69 : vector<8x4xi32>
    %cst_16 = arith.constant 0.000000e+00 : f32
    %71 = vector.broadcast %cst_16 : f32 to vector<8x4xf32>
    %72 = arith.select %70, %64, %71 : vector<8x4xi1>, vector<8x4xf32>
    %73 = vector.shape_cast %72 : vector<8x4xf32> to vector<1x8x4xf32>
    %cst_17 = arith.constant dense<0.000000e+00> : vector<1xf32>
    %74 = vector.multi_reduction <add>, %73, %cst_17 [1, 2] : vector<1x8x4xf32> to vector<1xf32>
    %75 = vector.shape_cast %74 : vector<1xf32> to vector<1x1x1xf32>
    %76 = vector.extract %75[0, 0, 0] : f32 from vector<1x1x1xf32>
    %cst_18 = arith.constant 9.765625E-4 : f32
    %77 = arith.mulf %76, %cst_18 : f32
    %78 = vector.broadcast %77 : f32 to vector<1x8x128xf32>
    %c0_19 = arith.constant 0 : index
    %c0_20 = arith.constant 0 : index
    %c0_21 = arith.constant 0 : index
    %79 = vector.load %arg6[%c0_19, %c0_20, %c0_21] : memref<1x8x128xf32, #tpu.memory_space<vmem>>, vector<1x8x128xf32>
    tpu.vector_store %arg6[%c0_19, %c0_20, %c0_21], %78 {strides = array<i32>} : memref<1x8x128xf32, #tpu.memory_space<vmem>>, vector<1x8x128xf32>,
    return
  }
  func.func @transform_0(%arg0: i32) -> (i32, i32) {
    %c0_i32 = arith.constant 0 : i32
    %c0_i32_0 = arith.constant 0 : i32
    return %arg0, %c0_i32 : i32, i32
  }
  func.func @transform_1(%arg0: i32) -> (i32, i32) {
    %c0_i32 = arith.constant 0 : i32
    %c0_i32_0 = arith.constant 0 : i32
    %c0_i32_1 = arith.constant 0 : i32
    return %c0_i32, %c0_i32_0 : i32, i32
  }
  func.func @transform_2(%arg0: i32) -> (i32, i32) {
    %c0_i32 = arith.constant 0 : i32
    %c0_i32_0 = arith.constant 0 : i32
    %c0_i32_1 = arith.constant 0 : i32
    return %c0_i32, %c0_i32_0 : i32, i32
  }
  func.func @transform_3(%arg0: i32) -> (i32, i32) {
    %c0_i32 = arith.constant 0 : i32
    %c0_i32_0 = arith.constant 0 : i32
    %c0_i32_1 = arith.constant 0 : i32
    return %c0_i32, %c0_i32_0 : i32, i32
  }
  func.func @transform_4(%arg0: i32) -> (i32, i32) {
    %c0_i32 = arith.constant 0 : i32
    %c0_i32_0 = arith.constant 0 : i32
    %c0_i32_1 = arith.constant 0 : i32
    return %c0_i32, %c0_i32_0 : i32, i32
  }
  func.func @transform_5(%arg0: i32) -> (i32, i32, i32) {
    %c0_i32 = arith.constant 0 : i32
    %c0_i32_0 = arith.constant 0 : i32
    %c0_i32_1 = arith.constant 0 : i32
    return %arg0, %c0_i32, %c0_i32_0 : i32, i32, i32
  }
}

</mosaic_0001>

<llo_original>
// kernel: tpu_custom_call.1
$region0: #{tpu_custom_call.1}
  #allocation0 [shape = 'u32[]', space=smem, size = 0x4, offset = 0x4, fixed_abs, tag = 'smem constant byte address 0x4 - core index']
  #allocation1 [shape = 'u32[72,128]{1,0:T(1,128)}', space=vmem, size = 0x9000, scoped, tag = 'internal scratch']
  %s0 = inlined_call_operand.vmem [shape: f32[8,128], index: 0, kind: input, shape index: {}]
  %s1 = inlined_call_operand.vmem [shape: f32[4,128], index: 1, kind: input, shape index: {}]
  %s2 = inlined_call_operand.vmem [shape: f32[1,128], index: 2, kind: input, shape index: {}]
  %s3 = inlined_call_operand.vmem [shape: f32[128,4], index: 3, kind: input, shape index: {}]
  %s4 = inlined_call_operand.vmem [shape: f32[4,4], index: 4, kind: input, shape index: {}]
  %s5 = inlined_call_operand.hbm [shape: f32[1,8,128], index: 5, kind: output, shape index: {}]
  %s6 = sld [smem:[#allocation0]]
  $region30: #{tpu_custom_call.1} parent=0
    _
  %s8 = ssub.s32 1, %s6
  %s9 = scalar_select 0, %s8, %s6
  $region1: #{tpu_custom_call.1} parent=0
    #allocation2 [shape = 'u8[4096]{0}', space=vmem, size = 0x1000, scoped, tag = 'output window, operand 0, single buffered']
    #allocation3 [shape = 's32[1]{0}', space=sflag, size = 0x4, scoped, tag = 'scoped memory for tpu_custom_call.1']
    %10 = vsyncpa [#allocation3], 0
    // Predicated region
    $region2: #{tpu_custom_call.1} parent=1 // pred_check
      _
    $region3: #{tpu_custom_call.1} parent=1 // pred_check_branch
      %12 = sbr.rel (0) target = $region5
    $region4: #{tpu_custom_call.1} parent=1 // pred_region
      _
    $region5: #{tpu_custom_call.1} parent=1 // pred_fallthru
      _
    // Predicated region
    $region6: #{tpu_custom_call.1} parent=1 // pred_check
      _
    $region7: #{tpu_custom_call.1} parent=1 // pred_check_branch
      %14 = sbr.rel (0) target = $region9
    $region8: #{tpu_custom_call.1} parent=1 // pred_region
      _
    $region9: #{tpu_custom_call.1} parent=1 // pred_fallthru
      _
    // Predicated region
    $region10: #{tpu_custom_call.1} parent=1 // pred_check
      _
    $region11: #{tpu_custom_call.1} parent=1 // pred_check_branch
      %16 = sbr.rel (0) target = $region13
    $region12: #{tpu_custom_call.1} parent=1 // pred_region
      _
    $region13: #{tpu_custom_call.1} parent=1 // pred_fallthru
      _
    // Predicated region
    $region14: #{tpu_custom_call.1} parent=1 // pred_check
      _
    $region15: #{tpu_custom_call.1} parent=1 // pred_check_branch
      %18 = sbr.rel (0) target = $region17
    $region16: #{tpu_custom_call.1} parent=1 // pred_region
      _
    $region17: #{tpu_custom_call.1} parent=1 // pred_fallthru
      _
    // Predicated region
    $region18: #{tpu_custom_call.1} parent=1 // pred_check
      _
    $region19: #{tpu_custom_call.1} parent=1 // pred_check_branch
      %20 = sbr.rel (0) target = $region21
    $region20: #{tpu_custom_call.1} parent=1 // pred_region
      _
    $region21: #{tpu_custom_call.1} parent=1 // pred_fallthru
      _
    %v21 = vld [vmem:[%s0] sm:$0xff]
    %v22 = vld [vmem:[%s1] sm:$0xf]
    %v23 = vld [vmem:[%s3] sm:$0xff]
    %v24 = vld [vmem:[%s3 + $0x8] sm:$0xff]
    %v25 = vld [vmem:[%s3 + $0x10] sm:$0xff]
    %v26 = vld [vmem:[%s3 + $0x18] sm:$0xff]
    %v27 = vld [vmem:[%s3 + $0x20] sm:$0xff]
    %v28 = vld [vmem:[%s3 + $0x28] sm:$0xff]
    %v29 = vld [vmem:[%s3 + $0x30] sm:$0xff]
    %v30 = vld [vmem:[%s3 + $0x38] sm:$0xff]
    %v31 = vld [vmem:[%s3 + $0x40] sm:$0xff]
    %v32 = vld [vmem:[%s3 + $0x48] sm:$0xff]
    %v33 = vld [vmem:[%s3 + $0x50] sm:$0xff]
    %v34 = vld [vmem:[%s3 + $0x58] sm:$0xff]
    %v35 = vld [vmem:[%s3 + $0x60] sm:$0xff]
    %v36 = vld [vmem:[%s3 + $0x68] sm:$0xff]
    %v37 = vld [vmem:[%s3 + $0x70] sm:$0xff]
    %v38 = vld [vmem:[%s3 + $0x78] sm:$0xff]
    %v39 = vld [vmem:[%s4] sm:$0xf]
    %v40 = vld [vmem:[%s2] sm:$0x1]
    %v42 = vperm.slane %v40, 0
    %v44 = vsub.f32 %v21, %v42
    %v45 = vmul.f32 %v44, %v44
    %v46 = vperm.slane %v22, 0
    %v47 = vsub.f32 %v21, %v46
    %v48 = vmul.f32 %v47, %v47
    %v49 = vperm.slane %v39, 0
    %50 = vmatpush.msra.mxu0 %v38
    %51 = vmatpush.msra.mxu0 %v37
    %52 = vmatpush.msra.mxu0 %v36
    %53 = vmatpush.msra.mxu0 %v35
    %54 = vmatpush.msra.mxu0 %v34
    %55 = vmatpush.msra.mxu0 %v33
    %56 = vmatpush.msra.mxu0 %v32
    %57 = vmatpush.msra.mxu0 %v31
    %58 = vmatpush.msra.mxu0 %v30
    %59 = vmatpush.msra.mxu0 %v29
    %60 = vmatpush.msra.mxu0 %v28
    %61 = vmatpush.msra.mxu0 %v27
    %62 = vmatpush.msra.mxu0 %v26
    %63 = vmatpush.msra.mxu0 %v25
    %64 = vmatpush.msra.mxu0 %v24
    %65 = vmatpush.msra.mxu0 %v23
    %66 = vmatmul.f32.gmra.mxu0 %v48
    %v67 = vpop.f32.mrf.mxu0
    %v68 = vadd.f32 %v49, %v67
    %69 = vdwg.mxu0
    %v70 = vperm.slane %v22, 1
    %v71 = vsub.f32 %v21, %v70
    %v72 = vmul.f32 %v71, %v71
    %v73 = vperm.slane %v39, 1
    %74 = vmatpush.msra.mxu0 %v38
    %75 = vmatpush.msra.mxu0 %v37
    %76 = vmatpush.msra.mxu0 %v36
    %77 = vmatpush.msra.mxu0 %v35
    %78 = vmatpush.msra.mxu0 %v34
    %79 = vmatpush.msra.mxu0 %v33
    %80 = vmatpush.msra.mxu0 %v32
    %81 = vmatpush.msra.mxu0 %v31
    %82 = vmatpush.msra.mxu0 %v30
    %83 = vmatpush.msra.mxu0 %v29
    %84 = vmatpush.msra.mxu0 %v28
    %85 = vmatpush.msra.mxu0 %v27
    %86 = vmatpush.msra.mxu0 %v26
    %87 = vmatpush.msra.mxu0 %v25
    %88 = vmatpush.msra.mxu0 %v24
    %89 = vmatpush.msra.mxu0 %v23
    %90 = vmatmul.f32.gmra.mxu0 %v72
    %v91 = vpop.f32.mrf.mxu0
    %v92 = vadd.f32 %v73, %v91
    %93 = vdwg.mxu0
    %v94 = vmin.f32 %v68, %v92
    %v95 = vperm.slane %v22, 2
    %v96 = vsub.f32 %v21, %v95
    %v97 = vmul.f32 %v96, %v96
    %v98 = vperm.slane %v39, 2
    %99 = vmatpush.msra.mxu0 %v38
    %100 = vmatpush.msra.mxu0 %v37
    %101 = vmatpush.msra.mxu0 %v36
    %102 = vmatpush.msra.mxu0 %v35
    %103 = vmatpush.msra.mxu0 %v34
    %104 = vmatpush.msra.mxu0 %v33
    %105 = vmatpush.msra.mxu0 %v32
    %106 = vmatpush.msra.mxu0 %v31
    %107 = vmatpush.msra.mxu0 %v30
    %108 = vmatpush.msra.mxu0 %v29
    %109 = vmatpush.msra.mxu0 %v28
    %110 = vmatpush.msra.mxu0 %v27
    %111 = vmatpush.msra.mxu0 %v26
    %112 = vmatpush.msra.mxu0 %v25
    %113 = vmatpush.msra.mxu0 %v24
    %114 = vmatpush.msra.mxu0 %v23
    %115 = vmatmul.f32.gmra.mxu0 %v97
    %v116 = vpop.f32.mrf.mxu0
    %v117 = vadd.f32 %v98, %v116
    %118 = vdwg.mxu0
    %v119 = vmin.f32 %v94, %v117
    %v120 = vperm.slane %v22, 3
    %v121 = vsub.f32 %v21, %v120
    %v122 = vmul.f32 %v121, %v121
    %v123 = vperm.slane %v39, 3
    %124 = vmatpush.msra.mxu0 %v38
    %125 = vmatpush.msra.mxu0 %v37
    %126 = vmatpush.msra.mxu0 %v36
    %127 = vmatpush.msra.mxu0 %v35
    %128 = vmatpush.msra.mxu0 %v34
    %129 = vmatpush.msra.mxu0 %v33
    %130 = vmatpush.msra.mxu0 %v32
    %131 = vmatpush.msra.mxu0 %v31
    %132 = vmatpush.msra.mxu0 %v30
    %133 = vmatpush.msra.mxu0 %v29
    %134 = vmatpush.msra.mxu0 %v28
    %135 = vmatpush.msra.mxu0 %v27
    %136 = vmatpush.msra.mxu0 %v26
    %137 = vmatpush.msra.mxu0 %v25
    %138 = vmatpush.msra.mxu0 %v24
    %139 = vmatpush.msra.mxu0 %v23
    %140 = vmatmul.f32.gmra.mxu0 %v122
    %v141 = vpop.f32.mrf.mxu0
    %v142 = vadd.f32 %v123, %v141
    %143 = vdwg.mxu0
    %v144 = vmin.f32 %v119, %v142
    %145 = vmatpush.msra.mxu0 %v38
    %146 = vmatpush.msra.mxu0 %v37
    %147 = vmatpush.msra.mxu0 %v36
    %148 = vmatpush.msra.mxu0 %v35
    %149 = vmatpush.msra.mxu0 %v34
    %150 = vmatpush.msra.mxu0 %v33
    %151 = vmatpush.msra.mxu0 %v32
    %152 = vmatpush.msra.mxu0 %v31
    %153 = vmatpush.msra.mxu0 %v30
    %154 = vmatpush.msra.mxu0 %v29
    %155 = vmatpush.msra.mxu0 %v28
    %156 = vmatpush.msra.mxu0 %v27
    %157 = vmatpush.msra.mxu0 %v26
    %158 = vmatpush.msra.mxu0 %v25
    %159 = vmatpush.msra.mxu0 %v24
    %160 = vmatpush.msra.mxu0 %v23
    %161 = vmatmul.f32.gmra.mxu0 %v45
    %v162 = vpop.f32.mrf.mxu0
    %v163 = vadd.f32 1.0, %v162
    %164 = vdwg.mxu0
    %v165 = vsub.f32 %v163, %v144
    %v166 = vmax.f32 %v165, 0.0
    %s167 = smul.u32 0, 8
    %v168 = vlaneseq
    %v169 = vshrl.u32 %v168, 7
    %v170 = vstv %s167
    %v171 = vadd.s32 %v170, %v169
    %vm172 = vcmp.lt.s32.totalorder %v171, 8
    %v173 = vsel %vm172, %v166, 0.0
    %vm174 = vcmask 31744
    %v175 = vsel %vm174, %v173, 0.0
    %176 = vadd.xlane.f32.xlu0 %v175
    %v177 = vpop.xlane.xlu0 %176
    %v178 = vrot.slane %v177, 4
    %v179 = vadd.f32 %v177, %v178
    %v180 = vrot.slane %v179, 2
    %v181 = vadd.f32 %v179, %v180
    %v182 = vrot.slane %v181, 1
    %v183 = vadd.f32 %v181, %v182
    %s184 = vtos %v183
    %s185 = smul.f32 %s184, 0.0009765625
    %v186 = vstv %s185
    %187 = vst [vmem:[#allocation2] sm:$0xff] %v186
    // Predicated region
    $region22: #{tpu_custom_call.1} parent=1 // pred_check
      _
    $region23: #{tpu_custom_call.1} parent=1 // pred_check_branch
      %189 = sbr.rel (0) target = $region25
    $region24: #{tpu_custom_call.1} parent=1 // pred_region
      %191 = vsyncadd [#allocation3], 0
      %s193 = sshll.u32 [#allocation2], 4
      %s194 = int_to_ptr.vmem [resolvable:$true] %s193
      %s195 = sshll.u32 %s5, 4
      %s196 = int_to_ptr.hbm [resolvable:$true] %s195
      %198 = dma.vmem_to_hbm [thread:$0]  %s194, 128, %s196, [#allocation3]
    $region25: #{tpu_custom_call.1} parent=1 // pred_fallthru
      _
    // Predicated region
    $region26: #{tpu_custom_call.1} parent=1 // pred_check
      _
    $region27: #{tpu_custom_call.1} parent=1 // pred_check_branch
      %200 = sbr.rel (0) target = $region29
    $region28: #{tpu_custom_call.1} parent=1 // pred_region
      %202 = dma.done [#allocation3], 128
    $region29: #{tpu_custom_call.1} parent=1 // pred_fallthru
      _
    %203 = vsyncpa [#allocation3], 1

</llo_original>
